<compile_context>
chip_gen: v6e
topology: v6e:2x2x1
jax: 0.10.0
libtpu: 0.0.40
codegen_flags: <defaults>
</compile_context>

<pallas_src>
import functools

import jax
import jax.numpy as jnp
from jax.experimental import pallas as pl
from jax.experimental.pallas import tpu as pltpu

MARGIN = 1.0
EPS = 1e-9


# --------------------------------------------------------------------------
# Kernel
# --------------------------------------------------------------------------
def _contrastive_kernel(o1_ref, o2_ref, t_ref, out_ref, dist_ref, *,
                        margin, eps, batch, tile_b, need_mask):
    """o1/o2: (TB, TD) native dtype; t: (TB, 1) f32; out: (8, 128) f32;
    dist_ref: (TB, 1) f32 scratch accumulating squared distances over D."""
    ib = pl.program_id(0)
    jd = pl.program_id(1)
    last_d = pl.num_programs(1) - 1
    last_b = pl.num_programs(0) - 1

    @pl.when(jd == 0)
    def _init():
        dist_ref[...] = jnp.zeros_like(dist_ref)

    # Partial squared distance for this D tile (f32 accumulate).
    diff = o2_ref[...].astype(jnp.float32) - o1_ref[...].astype(jnp.float32)
    dist_ref[...] += jnp.sum(diff * diff, axis=1, keepdims=True)

    @pl.when(jd == last_d)
    def _finalize():
        distances = dist_ref[...]                       # (TB, 1)
        t = t_ref[...].astype(jnp.float32)              # (TB, 1)
        hinge = jnp.maximum(margin - jnp.sqrt(distances + eps), 0.0)
        losses = 0.5 * (t * distances + (1.0 - t) * hinge * hinge)

        def _store(vals):
            # Lane-dense (8, 128) tile per batch-tile (disjoint -> "parallel"
            # is legal on the batch axis).
            out_ref[...] = jnp.full((8, 128), jnp.sum(vals), dtype=jnp.float32)

        if need_mask:
            # Only the last batch tile contains padded rows; full tiles skip
            # the iota/compare/select entirely.
            @pl.when(ib == last_b)
            def _masked():
                row = ib * tile_b + jax.lax.broadcasted_iota(
                    jnp.int32, (tile_b, 1), 0)
                _store(jnp.where(row < batch, losses, 0.0))

            @pl.when(ib != last_b)
            def _full():
                _store(losses)
        else:
            _store(losses)


# --------------------------------------------------------------------------
# Tile selection (generation / dtype aware)
# --------------------------------------------------------------------------
def _chip_profile():
    """Returns (target_tile_bytes, vmem_capacity_bytes_or_None, two_tc)."""
    vmem_cap = None
    kind = ""
    try:
        vmem_cap = int(pltpu.get_tpu_info().vmem_capacity_bytes)
    except Exception:
        vmem_cap = None
    try:
        kind = jax.devices()[0].device_kind.lower()
    except Exception:
        kind = ""

    if (vmem_cap is not None and vmem_cap <= (96 << 20)) or "v7" in kind:
        # v7x-class: 64 MiB VMEM per TC, 2 TensorCores sharing HBM.
        return 4 << 20, vmem_cap, True
    if "v5" in kind:
        # v5e (~820 GB/s HBM): 2-3 MiB tiles already amortize step overhead.
        return 3 << 20, vmem_cap, False
    # v6e-class (or unknown 128 MiB chips): larger tiles to stay near roofline.
    return 6 << 20, vmem_cap, False


def _pick_td(feat, itemsize, target_bytes, min_rows):
    """Pick a D tile that exactly divides D (no masked D edge blocks)."""
    row_bytes = feat * itemsize
    if feat % 128 != 0 or row_bytes * min_rows <= target_bytes:
        return feat
    cap_lanes = max(1, target_bytes // (min_rows * itemsize * 128))
    n_lane_blocks = feat // 128
    best = 1
    for d in range(1, n_lane_blocks + 1):
        if n_lane_blocks % d == 0 and d <= cap_lanes:
            best = d
    return best * 128


def _pick_tiles(batch, feat, itemsize, target_bytes, two_tc):
    # dtype-aware sublane packing: 8 rows for 32-bit, 16 for bf16, 32 for int8.
    sub = max(8, 32 // max(int(itemsize), 1))
    b_pad = -(-batch // sub) * sub

    min_rows = max(sub, 64)
    td = _pick_td(feat, itemsize, target_bytes, min_rows)

    tile_row_bytes = max(td * itemsize, 1)
    tb = (target_bytes // tile_row_bytes) // sub * sub
    tb = max(sub, min(int(tb), 1024, b_pad))

    if two_tc and b_pad >= 2 * sub:
        # Ensure >= 2 (and preferably an even number of) batch tiles so both
        # TensorCores get work on the "parallel" axis.
        nt = -(-b_pad // tb)
        if nt < 2:
            nt = 2
        elif nt % 2:
            nt += 1
        tb_even = (-(-b_pad // nt) + sub - 1) // sub * sub
        tb = min(tb, max(sub, tb_even))

    return tb, td, sub


# --------------------------------------------------------------------------
# Wrapper
# --------------------------------------------------------------------------
def contrastive_loss(output1, output2, target, margin=MARGIN,
                     size_average=True, _target_tile_bytes=None):
    """Pallas TPU implementation of ContrastiveLoss.forward."""
    B, D = output1.shape
    itemsize = jnp.dtype(output1.dtype).itemsize

    target_bytes, vmem_cap, two_tc = _chip_profile()
    if _target_tile_bytes is not None:       # test / tuning hook
        target_bytes = int(_target_tile_bytes)

    tb, td, _sub = _pick_tiles(B, D, itemsize, target_bytes, two_tc)
    num_b_tiles = -(-B // tb)
    num_d_tiles = D // td if D % td == 0 else -(-D // td)
    need_mask = (B % tb) != 0

    # target.float() in torch; tiny, so the wrapper cast/reshape is free.
    t = target.astype(jnp.float32).reshape(B, 1)

    kernel = functools.partial(
        _contrastive_kernel, margin=float(margin), eps=EPS,
        batch=B, tile_b=tb, need_mask=need_mask)

    cost = pl.CostEstimate(
        flops=3 * B * D,                       # sub, mul, add per element
        transcendentals=B,                     # one sqrt per row
        bytes_accessed=2 * B * D * itemsize + B * 4 + num_b_tiles * 8 * 128 * 4,
    )

    # Double-buffered working set: 2 embedding inputs x 2 buffers + target
    # + resident output tile + distance scratch; add generous headroom.
    in_tile_bytes = tb * td * itemsize
    working = (2 * 2 * in_tile_bytes) + (2 * tb * 4) + (2 * 8 * 128 * 4) + tb * 4
    vmem_limit = working + (8 << 20)
    if vmem_cap is not None:
        vmem_limit = min(max(vmem_limit, 32 << 20), int(vmem_cap * 0.75))
    else:
        vmem_limit = max(vmem_limit, 32 << 20)

    partials = pl.pallas_call(
        kernel,
        out_shape=jax.ShapeDtypeStruct((num_b_tiles * 8, 128), jnp.float32),
        grid_spec=pltpu.PrefetchScalarGridSpec(
            num_scalar_prefetch=0,
            grid=(num_b_tiles, num_d_tiles),
            in_specs=[
                pl.BlockSpec((tb, td), lambda i, j: (i, j)),
                pl.BlockSpec((tb, td), lambda i, j: (i, j)),
                pl.BlockSpec((tb, 1), lambda i, j: (i, 0)),
            ],
            out_specs=pl.BlockSpec((8, 128), lambda i, j: (i, 0)),
            scratch_shapes=[pltpu.VMEM((tb, 1), jnp.float32)],
        ),
        compiler_params=pltpu.CompilerParams(
            dimension_semantics=("parallel", "arbitrary"),
            vmem_limit_bytes=int(vmem_limit)),
        cost_estimate=cost,
    )(output1, output2, t)

    # Every element of a batch-tile's (8, 128) block equals that tile's
    # partial sum; read one element per tile.
    total = jnp.sum(partials.reshape(num_b_tiles, 8, 128)[:, 0, 0])
    return total / B if size_average else total


# --------------------------------------------------------------------------
# Pure-JAX reference
# --------------------------------------------------------------------------
def _reference(output1, output2, target, margin=MARGIN, size_average=True):
    o1 = output1.astype(jnp.float32)
    o2 = output2.astype(jnp.float32)
    distances = jnp.sum((o2 - o1) ** 2, axis=1)
    t = target.astype(jnp.float32)
    hinge = jnp.maximum(margin - jnp.sqrt(distances + EPS), 0.0)
    losses = 0.5 * (t * distances + (1.0 - t) * hinge ** 2)
    return jnp.mean(losses) if size_average else jnp.sum(losses)


if __name__ == "__main__":
    key = jax.random.PRNGKey(0)
    k1, k2, k3, k4, k5, k6 = jax.random.split(key, 6)

    # --- case 1: small f32, B multiple of tile, mean + sum -----------------
    B, D = 8, 32
    output1 = jax.random.normal(k1, (B, D), dtype=jnp.float32)
    output2 = jax.random.normal(k2, (B, D), dtype=jnp.float32)
    target = jax.random.bernoulli(k3, 0.5, (B,)).astype(jnp.int32)

    loss = jax.block_until_ready(
        contrastive_loss(output1, output2, target, MARGIN, True))
    ref = _reference(output1, output2, target, MARGIN, True)
    assert jnp.allclose(loss, ref, rtol=1e-5, atol=1e-6), (loss, ref)

    loss_s = jax.block_until_ready(
        contrastive_loss(output1, output2, target, MARGIN, False))
    ref_s = _reference(output1, output2, target, MARGIN, False)
    assert jnp.allclose(loss_s, ref_s, rtol=1e-5, atol=1e-6), (loss_s, ref_s)

    # --- case 2: bf16 inputs, B not a multiple of the batch tile -----------
    B2, D2 = 10, 32
    o1b = jax.random.normal(k4, (B2, D2), dtype=jnp.float32).astype(jnp.bfloat16)
    o2b = jax.random.normal(k5, (B2, D2), dtype=jnp.float32).astype(jnp.bfloat16)
    tb_ = jax.random.bernoulli(k6, 0.5, (B2,)).astype(jnp.int32)

    loss_b = jax.block_until_ready(contrastive_loss(o1b, o2b, tb_, MARGIN, True))
    ref_b = _reference(o1b, o2b, tb_, MARGIN, True)
    assert jnp.allclose(loss_b, ref_b, rtol=1e-5, atol=1e-6), (loss_b, ref_b)

    # --- case 3: force the multi-tile D path (and multiple batch tiles) ----
    B3, D3 = 16, 256
    o1c = jax.random.normal(k1, (B3, D3), dtype=jnp.float32)
    o2c = jax.random.normal(k2, (B3, D3), dtype=jnp.float32)
    tc_ = jax.random.bernoulli(k3, 0.5, (B3,)).astype(jnp.int32)

    loss_c = jax.block_until_ready(
        contrastive_loss(o1c, o2c, tc_, MARGIN, True, _target_tile_bytes=4096))
    ref_c = _reference(o1c, o2c, tc_, MARGIN, True)
    assert jnp.allclose(loss_c, ref_c, rtol=1e-5, atol=1e-6), (loss_c, ref_c)

    print("KERNEL_OK")
</pallas_src>

<mosaic_0001>
module attributes {stable_mosaic.version = 11 : i64} {
  func.func @_contrastive_kernel(%arg0: i32, %arg1: i32, %arg2: memref<8x32xf32, #tpu.memory_space<vmem>>, %arg3: memref<8x32xf32, #tpu.memory_space<vmem>>, %arg4: memref<8x1xf32, #tpu.memory_space<vmem>>, %arg5: memref<8x128xf32, #tpu.memory_space<vmem>>, %arg6: memref<8x1xf32, #tpu.memory_space<vmem>>) attributes {dimension_semantics = [#tpu.dimension_semantics<parallel>, #tpu.dimension_semantics<arbitrary>], iteration_bounds = array<i64: 1, 1>, scalar_prefetch = 0 : i64, scratch_operands = 1 : i64, tpu.core_type = #tpu.core_type<tc>, window_params = [{transform_indices = @transform_0, window_bounds = array<i64: 8, 32>}, {transform_indices = @transform_1, window_bounds = array<i64: 8, 32>}, {transform_indices = @transform_2, window_bounds = array<i64: 8, 1>}, {transform_indices = @transform_3, window_bounds = array<i64: 8, 128>}]} {
    %c0_i32 = arith.constant 0 : i32
    %0 = arith.cmpi eq, %arg1, %c0_i32 : i32
    %1 = arith.extui %0 : i1 to i32
    %c0_i32_0 = arith.constant 0 : i32
    %2 = arith.cmpi ne, %1, %c0_i32_0 : i32
    scf.if %2 {
      %cst_10 = arith.constant 0.000000e+00 : f32
      %15 = vector.broadcast %cst_10 : f32 to vector<8x1xf32>
      %c0_11 = arith.constant 0 : index
      %c0_12 = arith.constant 0 : index
      %16 = vector.load %arg6[%c0_11, %c0_12] : memref<8x1xf32, #tpu.memory_space<vmem>>, vector<8x1xf32>
      tpu.vector_store %arg6[%c0_11, %c0_12], %15 {strides = array<i32>} : memref<8x1xf32, #tpu.memory_space<vmem>>, vector<8x1xf32>,
    } else {
    }
    %c0 = arith.constant 0 : index
    %c0_1 = arith.constant 0 : index
    %3 = vector.load %arg3[%c0, %c0_1] : memref<8x32xf32, #tpu.memory_space<vmem>>, vector<8x32xf32>
    %c0_2 = arith.constant 0 : index
    %c0_3 = arith.constant 0 : index
    %4 = vector.load %arg2[%c0_2, %c0_3] : memref<8x32xf32, #tpu.memory_space<vmem>>, vector<8x32xf32>
    %5 = arith.subf %3, %4 : vector<8x32xf32>
    %c0_4 = arith.constant 0 : index
    %c0_5 = arith.constant 0 : index
    %6 = vector.load %arg6[%c0_4, %c0_5] : memref<8x1xf32, #tpu.memory_space<vmem>>, vector<8x1xf32>
    %7 = arith.mulf %5, %5 : vector<8x32xf32>
    %cst = arith.constant dense<0.000000e+00> : vector<8xf32>
    %8 = vector.multi_reduction <add>, %7, %cst [1] : vector<8x32xf32> to vector<8xf32>
    %9 = vector.shape_cast %8 : vector<8xf32> to vector<8x1xf32>
    %10 = arith.addf %6, %9 : vector<8x1xf32>
    %c0_6 = arith.constant 0 : index
    %c0_7 = arith.constant 0 : index
    %11 = vector.load %arg6[%c0_6, %c0_7] : memref<8x1xf32, #tpu.memory_space<vmem>>, vector<8x1xf32>
    tpu.vector_store %arg6[%c0_6, %c0_7], %10 {strides = array<i32>} : memref<8x1xf32, #tpu.memory_space<vmem>>, vector<8x1xf32>,
    %c0_i32_8 = arith.constant 0 : i32
    %12 = arith.cmpi eq, %arg1, %c0_i32_8 : i32
    %13 = arith.extui %12 : i1 to i32
    %c0_i32_9 = arith.constant 0 : i32
    %14 = arith.cmpi ne, %13, %c0_i32_9 : i32
    scf.if %14 {
      %c0_10 = arith.constant 0 : index
      %c0_11 = arith.constant 0 : index
      %15 = vector.load %arg6[%c0_10, %c0_11] : memref<8x1xf32, #tpu.memory_space<vmem>>, vector<8x1xf32>
      %c0_12 = arith.constant 0 : index
      %c0_13 = arith.constant 0 : index
      %16 = vector.load %arg4[%c0_12, %c0_13] : memref<8x1xf32, #tpu.memory_space<vmem>>, vector<8x1xf32>
      %cst_14 = arith.constant 9.99999971E-10 : f32
      %17 = vector.broadcast %cst_14 : f32 to vector<8x1xf32>
      %18 = arith.addf %15, %17 : vector<8x1xf32>
      %19 = math.sqrt %18 : vector<8x1xf32>
      %cst_15 = arith.constant 1.000000e+00 : f32
      %20 = vector.broadcast %cst_15 : f32 to vector<8x1xf32>
      %21 = arith.subf %20, %19 : vector<8x1xf32>
      %cst_16 = arith.constant 0.000000e+00 : f32
      %22 = vector.broadcast %cst_16 : f32 to vector<8x1xf32>
      %23 = arith.maximumf %21, %22 : vector<8x1xf32>
      %24 = arith.mulf %16, %15 : vector<8x1xf32>
      %cst_17 = arith.constant 1.000000e+00 : f32
      %25 = vector.broadcast %cst_17 : f32 to vector<8x1xf32>
      %26 = arith.subf %25, %16 : vector<8x1xf32>
      %27 = arith.mulf %26, %23 : vector<8x1xf32>
      %28 = arith.mulf %27, %23 : vector<8x1xf32>
      %29 = arith.addf %24, %28 : vector<8x1xf32>
      %cst_18 = arith.constant 5.000000e-01 : f32
      %30 = vector.broadcast %cst_18 : f32 to vector<8x1xf32>
      %31 = arith.mulf %30, %29 : vector<8x1xf32>
      %32 = vector.shape_cast %31 : vector<8x1xf32> to vector<1x8x1xf32>
      %cst_19 = arith.constant dense<0.000000e+00> : vector<1xf32>
      %33 = vector.multi_reduction <add>, %32, %cst_19 [1, 2] : vector<1x8x1xf32> to vector<1xf32>
      %34 = vector.shape_cast %33 : vector<1xf32> to vector<1x1x1xf32>
      %35 = vector.extract %34[0, 0, 0] : f32 from vector<1x1x1xf32>
      %36 = vector.broadcast %35 : f32 to vector<8x128xf32>
      %c0_20 = arith.constant 0 : index
      %c0_21 = arith.constant 0 : index
      %37 = vector.load %arg5[%c0_20, %c0_21] : memref<8x128xf32, #tpu.memory_space<vmem>>, vector<8x128xf32>
      tpu.vector_store %arg5[%c0_20, %c0_21], %36 {strides = array<i32>} : memref<8x128xf32, #tpu.memory_space<vmem>>, vector<8x128xf32>,
    } else {
    }
    return
  }
  func.func @transform_0(%arg0: i32, %arg1: i32) -> (i32, i32) {
    %c0_i32 = arith.constant 0 : i32
    return %arg0, %arg1 : i32, i32
  }
  func.func @transform_1(%arg0: i32, %arg1: i32) -> (i32, i32) {
    %c0_i32 = arith.constant 0 : i32
    return %arg0, %arg1 : i32, i32
  }
  func.func @transform_2(%arg0: i32, %arg1: i32) -> (i32, i32) {
    %c0_i32 = arith.constant 0 : i32
    %c0_i32_0 = arith.constant 0 : i32
    return %arg0, %c0_i32 : i32, i32
  }
  func.func @transform_3(%arg0: i32, %arg1: i32) -> (i32, i32) {
    %c0_i32 = arith.constant 0 : i32
    %c0_i32_0 = arith.constant 0 : i32
    return %arg0, %c0_i32 : i32, i32
  }
}

</mosaic_0001>

<llo_original>
// kernel: tpu_custom_call.1
$region0: #{tpu_custom_call.1}
  #allocation0 [shape = 'u32[]', space=smem, size = 0x4, offset = 0x4, fixed_abs, tag = 'smem constant byte address 0x4 - core index']
  #allocation1 [shape = 'u32[144,128]{1,0:T(1,128)}', space=vmem, size = 0x12000, scoped, tag = 'internal scratch']
  #allocation2 [shape = 'f32[8,1]{1,0:T(8,128)}', space=vmem, size = 0x1000, scoped, tag = 'scratch operand']
  %s0 = inlined_call_operand.vmem [shape: f32[8,32], index: 0, kind: input, shape index: {}]
  %s1 = inlined_call_operand.hbm [shape: f32[8,32], index: 1, kind: input, shape index: {}]
  %s2 = inlined_call_operand.vmem [shape: f32[8,1], index: 2, kind: input, shape index: {}]
  %s3 = inlined_call_operand.hbm [shape: f32[8,128], index: 3, kind: output, shape index: {}]
  %s4 = sld [smem:[#allocation0]]
  $region34: #{tpu_custom_call.1} parent=0
    _
  %s6 = ssub.s32 1, %s4
  %s7 = scalar_select 0, %s6, %s4
  $region1: #{tpu_custom_call.1} parent=0
    #allocation3 [shape = 'u8[4096]{0}', space=vmem, size = 0x1000, scoped, tag = 'input window, operand 1, single buffered']
    #allocation4 [shape = 's32[1]{0}', space=sflag, size = 0x4, scoped, tag = 'scoped memory for tpu_custom_call.1']
    #allocation5 [shape = 's32[1]{0}', space=sflag, size = 0x4, scoped, tag = 'scoped memory for tpu_custom_call.1']
    #allocation6 [shape = 'u8[4096]{0}', space=vmem, size = 0x1000, scoped, tag = 'output window, operand 0, single buffered']
    %8 = vsyncpa [#allocation4], 0
    %9 = vsyncpa [#allocation5], 0
    // Predicated region
    $region2: #{tpu_custom_call.1} parent=1 // pred_check
      _
    $region3: #{tpu_custom_call.1} parent=1 // pred_check_branch
      %11 = sbr.rel (0) target = $region5
    $region4: #{tpu_custom_call.1} parent=1 // pred_region
      _
    $region5: #{tpu_custom_call.1} parent=1 // pred_fallthru
      _
    // Predicated region
    $region6: #{tpu_custom_call.1} parent=1 // pred_check
      _
    $region7: #{tpu_custom_call.1} parent=1 // pred_check_branch
      %13 = sbr.rel (0) target = $region9
    $region8: #{tpu_custom_call.1} parent=1 // pred_region
      %s15 = ssub.s32 128, 128
      %16 = vsyncadd [#allocation4], %s15
      %s18 = sshll.u32 [#allocation3], 4
      %s19 = int_to_ptr.vmem [resolvable:$true] %s18
      %21 = dma.hbm_to_vmem [thread:$0]  %s1, 128, %s19, [#allocation4]
    $region9: #{tpu_custom_call.1} parent=1 // pred_fallthru
      _
    // Predicated region
    $region10: #{tpu_custom_call.1} parent=1 // pred_check
      _
    $region11: #{tpu_custom_call.1} parent=1 // pred_check_branch
      %23 = sbr.rel (0) target = $region13
    $region12: #{tpu_custom_call.1} parent=1 // pred_region
      _
    $region13: #{tpu_custom_call.1} parent=1 // pred_fallthru
      _
    // Predicated region
    $region14: #{tpu_custom_call.1} parent=1 // pred_check
      _
    $region15: #{tpu_custom_call.1} parent=1 // pred_check_branch
      %25 = sbr.rel (0) target = $region17
    $region16: #{tpu_custom_call.1} parent=1 // pred_region
      %26 = dma.done [#allocation4], 128
    $region17: #{tpu_custom_call.1} parent=1 // pred_fallthru
      _
    %p27 = scmp.eq.s32.totalorder 0, 0
    // Predicated region
    $region18: #{tpu_custom_call.1} parent=1 // pred_check
      %p28 = pneg %p27
    $region19: #{tpu_custom_call.1} parent=1 // pred_check_branch
      %30 = sbr.rel (%p28) target = $region21
    $region20: #{tpu_custom_call.1} parent=1 // pred_region
      %vm31 = vcmask 7168
      %32 = vst.msk [vmem:[#allocation2] sm:$0xff] %vm31, 0.0
    $region21: #{tpu_custom_call.1} parent=1 // pred_fallthru
      _
    %v33 = vld [vmem:[#allocation3] sm:$0xff]
    %v34 = vld [vmem:[%s0] sm:$0xff]
    %v35 = vsub.f32 %v33, %v34
    %v36 = vld [vmem:[#allocation2] sm:$0xff]
    %v37 = vmul.f32 %v35, %v35
    %vm38 = vcmask 261120
    %v39 = vsel %vm38, %v37, 0.0
    %40 = vadd.xlane.f32.xlu0 %v39
    %v41 = vpop.xlane.xlu0 %40
    %v42 = vadd.f32 %v36, %v41
    %vm43 = vcmask 7168
    %44 = vst.msk [vmem:[#allocation2] sm:$0xff] %vm43, %v42
    // Predicated region
    $region22: #{tpu_custom_call.1} parent=1 // pred_check
      %p45 = pneg %p27
    $region23: #{tpu_custom_call.1} parent=1 // pred_check_branch
      %47 = sbr.rel (%p45) target = $region25
    $region24: #{tpu_custom_call.1} parent=1 // pred_region
      %v48 = vld [vmem:[#allocation2] sm:$0xff]
      %v49 = vld [vmem:[%s2] sm:$0xff]
      %v50 = vadd.f32 %v48, 1e-09
      %v51 = vrsqrt.pop %v50
      %v52 = vmul.f32 %v50, %v51
      %vm53 = vcmp.eq.f32.partialorder %v50, inf
      %v54 = vsel %vm53, %v50, %v52
      %vm55 = vcmp.eq.f32.partialorder %v50, 0.0
      %v56 = vand.u32 %v50, 2147483648
      %v57 = vsel %vm55, %v56, %v54
      %v58 = vsub.f32 1.0, %v57
      %v59 = vmax.f32 %v58, 0.0
      %v60 = vmul.f32 %v49, %v48
      %v61 = vsub.f32 1.0, %v49
      %v62 = vmul.f32 %v61, %v59
      %v63 = vmul.f32 %v62, %v59
      %v64 = vadd.f32 %v60, %v63
      %v65 = vmul.f32 %v64, 0.5
      %v66 = vsel %vm43, %v65, 0.0
      %67 = vadd.xlane.f32.xlu0 %v66
      %v68 = vpop.xlane.xlu0 %67
      %v69 = vrot.slane %v68, 4
      %v70 = vadd.f32 %v68, %v69
      %v71 = vrot.slane %v70, 2
      %v72 = vadd.f32 %v70, %v71
      %v73 = vrot.slane %v72, 1
      %v74 = vadd.f32 %v72, %v73
      %s75 = vtos %v74
      %v76 = vstv %s75
      %77 = vst [vmem:[#allocation6] sm:$0xff] %v76
    $region25: #{tpu_custom_call.1} parent=1 // pred_fallthru
      _
    // Predicated region
    $region26: #{tpu_custom_call.1} parent=1 // pred_check
      _
    $region27: #{tpu_custom_call.1} parent=1 // pred_check_branch
      %79 = sbr.rel (0) target = $region29
    $region28: #{tpu_custom_call.1} parent=1 // pred_region
      %s81 = ssub.s32 128, 128
      %82 = vsyncadd [#allocation5], %s81
      %s84 = sshll.u32 [#allocation6], 4
      %s85 = int_to_ptr.vmem [resolvable:$true] %s84
      %87 = dma.vmem_to_hbm [thread:$0]  %s85, 128, %s3, [#allocation5]
    $region29: #{tpu_custom_call.1} parent=1 // pred_fallthru
      _
    // Predicated region
    $region30: #{tpu_custom_call.1} parent=1 // pred_check
      _
    $region31: #{tpu_custom_call.1} parent=1 // pred_check_branch
      %89 = sbr.rel (0) target = $region33
    $region32: #{tpu_custom_call.1} parent=1 // pred_region
      %90 = dma.done [#allocation5], 128
    $region33: #{tpu_custom_call.1} parent=1 // pred_fallthru
      _
    %91 = vsyncpa [#allocation4], 1
    %92 = vsyncpa [#allocation5], 1

</llo_original>
